<compile_context>
chip_gen: v7x
topology: tpu7x:2x2x1
jax: 0.10.0
libtpu: 0.0.40
codegen_flags: <defaults>
</compile_context>

<pallas_src>
import functools

import jax
import jax.numpy as jnp
from jax.experimental import pallas as pl
from jax.experimental.pallas import tpu as pltpu


def _dwsep_kernel(xbuf_ref, wdw_ref, wpw_ref, o_ref, *, Wp, np_pad, halo):
    # xbuf_ref: (Cin, L)    zero-padded, flattened spatial frame for this batch element
    #                       L = np_pad + 2*halo ; frame origin sits at lane offset `halo`
    # wdw_ref : (Cin, 9)    depthwise 3x3 taps, row-major (dy, dx)
    # wpw_ref : (Cout, Cin) pointwise 1x1 weights
    # o_ref   : (Cout, np_pad) output in the padded frame (lane-dense, multiple of 128)
    wdw = wdw_ref[...].astype(jnp.float32)

    # ---- depthwise 3x3: 9 shifted multiply-accumulates on the VPU ----
    acc = None
    for dy in range(3):
        for dx in range(3):
            k = dy * 3 + dx
            off = (dy - 1) * Wp + (dx - 1)
            start = halo + off                                  # static, always >= 0
            tap = xbuf_ref[:, start:start + np_pad].astype(jnp.float32)
            term = tap * wdw[:, k:k + 1]                        # per-channel scalar
            acc = term if acc is None else acc + term           # fused accumulation

    # ---- pointwise 1x1: channel mixing as one MXU matmul ----
    out = jnp.dot(wpw_ref[...].astype(jnp.float32), acc,
                  preferred_element_type=jnp.float32)
    o_ref[...] = out.astype(o_ref.dtype)


def depthwise_separable_conv(x, w_dw, w_pw):
    """x: (B, Cin, H, W); w_dw: (Cin, 1, 3, 3); w_pw: (Cout, Cin, 1, 1).
    Matches nn.Conv2d(groups=Cin, k=3, s=1, p=1, bias=False) -> Conv2d(1x1, bias=False).
    Returns (B, Cout, H, W)."""
    B, Cin, H, W = x.shape
    Cout = w_pw.shape[0]
    Hp, Wp = H + 2, W + 2
    Np = Hp * Wp
    np_pad = ((Np + 127) // 128) * 128   # lane-dense output (multiple of 128)
    halo = Wp + 1                        # covers the most negative/positive tap offset
    L = np_pad + 2 * halo

    # Hoisted prepass (plain JAX): zero ring for padding=1, flatten, add halo/lane pad.
    x_pad = jnp.pad(x, ((0, 0), (0, 0), (1, 1), (1, 1)))
    xflat = x_pad.reshape(B, Cin, Np)
    xbuf = jnp.pad(xflat, ((0, 0), (0, 0), (halo, np_pad - Np + halo)))

    wdw2 = w_dw.reshape(Cin, 9)
    wpw2 = w_pw.reshape(Cout, Cin)

    kernel = functools.partial(_dwsep_kernel, Wp=Wp, np_pad=np_pad, halo=halo)

    out = pl.pallas_call(
        kernel,
        out_shape=jax.ShapeDtypeStruct((B, Cout, np_pad), x.dtype),
        grid_spec=pltpu.PrefetchScalarGridSpec(
            num_scalar_prefetch=0,
            grid=(B,),
            in_specs=[
                pl.BlockSpec((None, Cin, L), lambda b: (b, 0, 0)),   # one batch tile
                pl.BlockSpec((Cin, 9), lambda b: (0, 0)),            # depthwise taps
                pl.BlockSpec((Cout, Cin), lambda b: (0, 0)),         # pointwise weights
            ],
            out_specs=pl.BlockSpec((None, Cout, np_pad), lambda b: (b, 0, 0)),
        ),
        compiler_params=pltpu.CompilerParams(dimension_semantics=("parallel",)),
    )(xbuf, wdw2, wpw2)

    # Back to the image frame; drop the padding ring and the lane padding.
    out = out[:, :, :Np].reshape(B, Cout, Hp, Wp)
    return out[:, :, 1:H + 1, 1:W + 1]


def ref_forward(x, w_dw, w_pw):
    """Pure-JAX reference matching the PyTorch module semantics."""
    B, Cin, H, W = x.shape
    xp = jnp.pad(x, ((0, 0), (0, 0), (1, 1), (1, 1)))
    dw = jnp.zeros((B, Cin, H, W), jnp.float32)
    for dy in range(3):
        for dx in range(3):
            dw = dw + xp[:, :, dy:dy + H, dx:dx + W] * w_dw[:, 0, dy, dx][None, :, None, None]
    return jnp.einsum("oc,bchw->bohw", w_pw[:, :, 0, 0], dw,
                      precision=jax.lax.Precision.HIGHEST)


if __name__ == "__main__":
    B, Cin, Cout, H, W = 2, 4, 8, 16, 16

    key = jax.random.PRNGKey(0)
    kx, kd, kp = jax.random.split(key, 3)

    x = jax.random.normal(kx, (B, Cin, H, W), dtype=jnp.float32)
    w_dw = 0.5 * jax.random.normal(kd, (Cin, 1, 3, 3), dtype=jnp.float32)   # depthwise.weight
    w_pw = 0.5 * jax.random.normal(kp, (Cout, Cin, 1, 1), dtype=jnp.float32)  # pointwise.weight

    out = depthwise_separable_conv(x, w_dw, w_pw)
    out = jax.block_until_ready(out)

    ref = ref_forward(x, w_dw, w_pw)
    assert out.shape == (B, Cout, H, W)
    assert jnp.allclose(out, ref, atol=1e-4, rtol=1e-4), "mismatch vs reference"

    print("KERNEL_OK")
</pallas_src>

<mosaic_0001>
module attributes {stable_mosaic.version = 11 : i64} {
  func.func @_dwsep_kernel(%arg0: i32, %arg1: memref<1x4x422xf32, #tpu.memory_space<vmem>>, %arg2: memref<4x9xf32, #tpu.memory_space<vmem>>, %arg3: memref<8x4xf32, #tpu.memory_space<vmem>>, %arg4: memref<1x8x384xf32, #tpu.memory_space<vmem>>) attributes {dimension_semantics = [#tpu.dimension_semantics<parallel>], iteration_bounds = array<i64: 2>, scalar_prefetch = 0 : i64, scratch_operands = 0 : i64, tpu.core_type = #tpu.core_type<tc>, window_params = [{transform_indices = @transform_0, window_bounds = array<i64: 1, 4, 422>}, {pipeline_mode = #tpu.pipeline_mode<synchronous>, transform_indices = @transform_1, window_bounds = array<i64: 4, 9>}, {pipeline_mode = #tpu.pipeline_mode<synchronous>, transform_indices = @transform_2, window_bounds = array<i64: 8, 4>}, {transform_indices = @transform_3, window_bounds = array<i64: 1, 8, 384>}]} {
    %c0 = arith.constant 0 : index
    %c0_0 = arith.constant 0 : index
    %0 = vector.load %arg2[%c0, %c0_0] : memref<4x9xf32, #tpu.memory_space<vmem>>, vector<4x9xf32>
    %c0_1 = arith.constant 0 : index
    %c0_2 = arith.constant 0 : index
    %c0_3 = arith.constant 0 : index
    %1 = vector.load %arg1[%c0_1, %c0_2, %c0_3] : memref<1x4x422xf32, #tpu.memory_space<vmem>>, vector<1x4x384xf32>
    %2 = vector.shape_cast %1 : vector<1x4x384xf32> to vector<4x384xf32>
    %3 = vector.extract_strided_slice %0 {offsets = [0, 0], sizes = [4, 1], strides = [1, 1]} : vector<4x9xf32> to vector<4x1xf32>
    %4 = vector.broadcast %3 : vector<4x1xf32> to vector<4x384xf32>
    %5 = arith.mulf %2, %4 : vector<4x384xf32>
    %c0_4 = arith.constant 0 : index
    %c0_5 = arith.constant 0 : index
    %c1 = arith.constant 1 : index
    %6 = vector.load %arg1[%c0_4, %c0_5, %c1] : memref<1x4x422xf32, #tpu.memory_space<vmem>>, vector<1x4x384xf32>
    %7 = vector.shape_cast %6 : vector<1x4x384xf32> to vector<4x384xf32>
    %8 = vector.extract_strided_slice %0 {offsets = [0, 1], sizes = [4, 1], strides = [1, 1]} : vector<4x9xf32> to vector<4x1xf32>
    %9 = vector.broadcast %8 : vector<4x1xf32> to vector<4x384xf32>
    %10 = arith.mulf %7, %9 : vector<4x384xf32>
    %11 = arith.addf %5, %10 : vector<4x384xf32>
    %c0_6 = arith.constant 0 : index
    %c0_7 = arith.constant 0 : index
    %c2 = arith.constant 2 : index
    %12 = vector.load %arg1[%c0_6, %c0_7, %c2] : memref<1x4x422xf32, #tpu.memory_space<vmem>>, vector<1x4x384xf32>
    %13 = vector.shape_cast %12 : vector<1x4x384xf32> to vector<4x384xf32>
    %14 = vector.extract_strided_slice %0 {offsets = [0, 2], sizes = [4, 1], strides = [1, 1]} : vector<4x9xf32> to vector<4x1xf32>
    %15 = vector.broadcast %14 : vector<4x1xf32> to vector<4x384xf32>
    %16 = arith.mulf %13, %15 : vector<4x384xf32>
    %17 = arith.addf %11, %16 : vector<4x384xf32>
    %c0_8 = arith.constant 0 : index
    %c0_9 = arith.constant 0 : index
    %c18 = arith.constant 18 : index
    %18 = vector.load %arg1[%c0_8, %c0_9, %c18] : memref<1x4x422xf32, #tpu.memory_space<vmem>>, vector<1x4x384xf32>
    %19 = vector.shape_cast %18 : vector<1x4x384xf32> to vector<4x384xf32>
    %20 = vector.extract_strided_slice %0 {offsets = [0, 3], sizes = [4, 1], strides = [1, 1]} : vector<4x9xf32> to vector<4x1xf32>
    %21 = vector.broadcast %20 : vector<4x1xf32> to vector<4x384xf32>
    %22 = arith.mulf %19, %21 : vector<4x384xf32>
    %23 = arith.addf %17, %22 : vector<4x384xf32>
    %c0_10 = arith.constant 0 : index
    %c0_11 = arith.constant 0 : index
    %c19 = arith.constant 19 : index
    %24 = vector.load %arg1[%c0_10, %c0_11, %c19] : memref<1x4x422xf32, #tpu.memory_space<vmem>>, vector<1x4x384xf32>
    %25 = vector.shape_cast %24 : vector<1x4x384xf32> to vector<4x384xf32>
    %26 = vector.extract_strided_slice %0 {offsets = [0, 4], sizes = [4, 1], strides = [1, 1]} : vector<4x9xf32> to vector<4x1xf32>
    %27 = vector.broadcast %26 : vector<4x1xf32> to vector<4x384xf32>
    %28 = arith.mulf %25, %27 : vector<4x384xf32>
    %29 = arith.addf %23, %28 : vector<4x384xf32>
    %c0_12 = arith.constant 0 : index
    %c0_13 = arith.constant 0 : index
    %c20 = arith.constant 20 : index
    %30 = vector.load %arg1[%c0_12, %c0_13, %c20] : memref<1x4x422xf32, #tpu.memory_space<vmem>>, vector<1x4x384xf32>
    %31 = vector.shape_cast %30 : vector<1x4x384xf32> to vector<4x384xf32>
    %32 = vector.extract_strided_slice %0 {offsets = [0, 5], sizes = [4, 1], strides = [1, 1]} : vector<4x9xf32> to vector<4x1xf32>
    %33 = vector.broadcast %32 : vector<4x1xf32> to vector<4x384xf32>
    %34 = arith.mulf %31, %33 : vector<4x384xf32>
    %35 = arith.addf %29, %34 : vector<4x384xf32>
    %c0_14 = arith.constant 0 : index
    %c0_15 = arith.constant 0 : index
    %c36 = arith.constant 36 : index
    %36 = vector.load %arg1[%c0_14, %c0_15, %c36] : memref<1x4x422xf32, #tpu.memory_space<vmem>>, vector<1x4x384xf32>
    %37 = vector.shape_cast %36 : vector<1x4x384xf32> to vector<4x384xf32>
    %38 = vector.extract_strided_slice %0 {offsets = [0, 6], sizes = [4, 1], strides = [1, 1]} : vector<4x9xf32> to vector<4x1xf32>
    %39 = vector.broadcast %38 : vector<4x1xf32> to vector<4x384xf32>
    %40 = arith.mulf %37, %39 : vector<4x384xf32>
    %41 = arith.addf %35, %40 : vector<4x384xf32>
    %c0_16 = arith.constant 0 : index
    %c0_17 = arith.constant 0 : index
    %c37 = arith.constant 37 : index
    %42 = vector.load %arg1[%c0_16, %c0_17, %c37] : memref<1x4x422xf32, #tpu.memory_space<vmem>>, vector<1x4x384xf32>
    %43 = vector.shape_cast %42 : vector<1x4x384xf32> to vector<4x384xf32>
    %44 = vector.extract_strided_slice %0 {offsets = [0, 7], sizes = [4, 1], strides = [1, 1]} : vector<4x9xf32> to vector<4x1xf32>
    %45 = vector.broadcast %44 : vector<4x1xf32> to vector<4x384xf32>
    %46 = arith.mulf %43, %45 : vector<4x384xf32>
    %47 = arith.addf %41, %46 : vector<4x384xf32>
    %c0_18 = arith.constant 0 : index
    %c0_19 = arith.constant 0 : index
    %c38 = arith.constant 38 : index
    %48 = vector.load %arg1[%c0_18, %c0_19, %c38] : memref<1x4x422xf32, #tpu.memory_space<vmem>>, vector<1x4x384xf32>
    %49 = vector.shape_cast %48 : vector<1x4x384xf32> to vector<4x384xf32>
    %50 = vector.extract_strided_slice %0 {offsets = [0, 8], sizes = [4, 1], strides = [1, 1]} : vector<4x9xf32> to vector<4x1xf32>
    %51 = vector.broadcast %50 : vector<4x1xf32> to vector<4x384xf32>
    %52 = arith.mulf %49, %51 : vector<4x384xf32>
    %53 = arith.addf %47, %52 : vector<4x384xf32>
    %c0_20 = arith.constant 0 : index
    %c0_21 = arith.constant 0 : index
    %54 = vector.load %arg3[%c0_20, %c0_21] : memref<8x4xf32, #tpu.memory_space<vmem>>, vector<8x4xf32>
    %cst = arith.constant dense<0.000000e+00> : vector<8x384xf32>
    %55 = tpu.matmul %54, %53, %cst {dimension_numbers = #tpu.dot_dimension_numbers<[1], [0], [0], [1], [0, 0, 1, 1], [], []>} : vector<8x4xf32>, vector<4x384xf32>, vector<8x384xf32> -> vector<8x384xf32>
    %c0_22 = arith.constant 0 : index
    %c0_23 = arith.constant 0 : index
    %c0_24 = arith.constant 0 : index
    %56 = vector.load %arg4[%c0_22, %c0_23, %c0_24] : memref<1x8x384xf32, #tpu.memory_space<vmem>>, vector<1x8x384xf32>
    %57 = vector.shape_cast %56 : vector<1x8x384xf32> to vector<8x384xf32>
    %58 = vector.shape_cast %55 : vector<8x384xf32> to vector<1x8x384xf32>
    tpu.vector_store %arg4[%c0_22, %c0_23, %c0_24], %58 {strides = array<i32>} : memref<1x8x384xf32, #tpu.memory_space<vmem>>, vector<1x8x384xf32>,
    return
  }
  func.func @transform_0(%arg0: i32) -> (i32, i32, i32) {
    %c0_i32 = arith.constant 0 : i32
    %c0_i32_0 = arith.constant 0 : i32
    %c0_i32_1 = arith.constant 0 : i32
    return %arg0, %c0_i32, %c0_i32_0 : i32, i32, i32
  }
  func.func @transform_1(%arg0: i32) -> (i32, i32) {
    %c0_i32 = arith.constant 0 : i32
    %c0_i32_0 = arith.constant 0 : i32
    %c0_i32_1 = arith.constant 0 : i32
    return %c0_i32, %c0_i32_0 : i32, i32
  }
  func.func @transform_2(%arg0: i32) -> (i32, i32) {
    %c0_i32 = arith.constant 0 : i32
    %c0_i32_0 = arith.constant 0 : i32
    %c0_i32_1 = arith.constant 0 : i32
    return %c0_i32, %c0_i32_0 : i32, i32
  }
  func.func @transform_3(%arg0: i32) -> (i32, i32, i32) {
    %c0_i32 = arith.constant 0 : i32
    %c0_i32_0 = arith.constant 0 : i32
    %c0_i32_1 = arith.constant 0 : i32
    return %arg0, %c0_i32, %c0_i32_0 : i32, i32, i32
  }
}

</mosaic_0001>

<llo_original>
// kernel: tpu_custom_call.1
$region0: #{tpu_custom_call.1}
  #allocation0 [shape = 'u32[]', space=smem, size = 0x4, offset = 0x4, fixed_abs, tag = 'smem constant byte address 0x4 - core index']
  #allocation1 [shape = 'u32[144,128]{1,0:T(1,128)}', space=vmem, size = 0x12000, scoped, tag = 'internal scratch']
  %s0 = inlined_call_operand.hbm [shape: f32[2,4,422], index: 0, kind: input, shape index: {}]
  %s1 = inlined_call_operand.vmem [shape: f32[4,9], index: 1, kind: input, shape index: {}]
  %s2 = inlined_call_operand.vmem [shape: f32[8,4], index: 2, kind: input, shape index: {}]
  %s3 = inlined_call_operand.hbm [shape: f32[2,8,384], index: 3, kind: output, shape index: {}]
  %s4 = sld [smem:[#allocation0]]
  $region49: #{tpu_custom_call.1} parent=0
    _
  %s6 = ssub.s32 1, %s4
  %s7 = scalar_select 0, %s6, %s4
  $region1: #{tpu_custom_call.1} parent=0
    #allocation2 [shape = 'u8[16384]{0}', space=vmem, size = 0x4000, scoped, tag = 'input window, operand 0']
    #allocation3 [shape = 's32[2]{0}', space=sflag, size = 0x8, scoped, tag = 'scoped memory for tpu_custom_call.1']
    #allocation4 [shape = 's32[2]{0}', space=sflag, size = 0x8, scoped, tag = 'scoped memory for tpu_custom_call.1']
    #allocation5 [shape = 'u8[24576]{0}', space=vmem, size = 0x6000, scoped, tag = 'output window, operand 0']
    %8 = vsyncpa [#allocation3], 0
    %s9 = scalar_lea.sflag [#allocation3], 1
    %10 = vsyncpa %s9, 0
    %11 = vsyncpa [#allocation4], 0
    %s12 = scalar_lea.sflag [#allocation4], 1
    %13 = vsyncpa %s12, 0
    loop: start=0, step=1, limit=4
    $region2: #{tpu_custom_call.1} parent=1 // loop_pre_header
      _
    $region3: #{tpu_custom_call.1} parent=1 // loop_header
      %s15 = sphi 0, %s19
      %p16 = scmp.ge.s32.totalorder %s15, 4
      %s25 = sphi 0, %s27
      %s28 = sphi 0, %s25
      %s29 = sphi 0, %s28
      %s45 = sphi 0, %s29
      %s49 = sphi 0, %s49
      %s51 = sphi 0, %s49
      %s52 = sphi 0, %s51
      %s66 = sphi 0, %s52
      %s70 = sphi 0, %s70
      %s72 = sphi 0, %s70
      %s73 = sphi 0, %s72
      %s87 = sphi 0, %s73
      %s93 = sphi 0, %s95
      %s96 = sphi 0, %s93
      %s97 = sphi 0, %s96
      %s113 = sphi 0, %s97
    $region4: #{tpu_custom_call.1} parent=1 // loop_header_branch
      %18 = sbr.rel (%p16) target = $region8
    $region5: #{tpu_custom_call.1} parent=1 // loop_body
      %s20 = ssub.s32 %s15, 1
      %s21 = ssub.s32 %s15, 2
      %s22 = sadd.s32 %s15, 1
      %s23 = ssub.s32 %s15, %s22
      %p24 = scmp.eq.s32.totalorder %s23, 0
      %s26 = sadd.s32 %s25, 1
      %s27 = scalar_select %p24, %s25, %s26
      %p30 = pneg %p24
      %p31 = scmp.eq.s32.totalorder %s15, 1
      %p32 = por %p30, %p31
      %p33 = scmp.ne.s32.totalorder %s25, %s28
      %p34 = scmp.eq.s32.totalorder %s15, 0
      %p35 = por %p33, %p34
      %p36 = scmp.ne.s32.totalorder %s25, %s28
      %p37 = scmp.eq.s32.totalorder %s20, 1
      %p38 = por %p36, %p37
      %p39 = scmp.ne.s32.totalorder %s28, %s29
      %p40 = scmp.eq.s32.totalorder %s20, 0
      %p41 = por %p39, %p40
      %p42 = scmp.ne.s32.totalorder %s28, %s29
      %p43 = scmp.eq.s32.totalorder %s21, 1
      %p44 = por %p42, %p43
      %p46 = scmp.ne.s32.totalorder %s29, %s45
      %p47 = scmp.eq.s32.totalorder %s21, 0
      %p48 = por %p46, %p47
      %s50 = sadd.s32 %s49, 1
      %p53 = scmp.eq.s32.totalorder %s15, 1
      %p54 = scmp.ne.s32.totalorder %s49, %s51
      %p55 = scmp.eq.s32.totalorder %s15, 0
      %p56 = por %p54, %p55
      %p57 = scmp.ne.s32.totalorder %s49, %s51
      %p58 = scmp.eq.s32.totalorder %s20, 1
      %p59 = por %p57, %p58
      %p60 = scmp.ne.s32.totalorder %s51, %s52
      %p61 = scmp.eq.s32.totalorder %s20, 0
      %p62 = por %p60, %p61
      %p63 = scmp.ne.s32.totalorder %s51, %s52
      %p64 = scmp.eq.s32.totalorder %s21, 1
      %p65 = por %p63, %p64
      %p67 = scmp.ne.s32.totalorder %s52, %s66
      %p68 = scmp.eq.s32.totalorder %s21, 0
      %p69 = por %p67, %p68
      %s71 = sadd.s32 %s70, 1
      %p74 = scmp.eq.s32.totalorder %s15, 1
      %p75 = scmp.ne.s32.totalorder %s70, %s72
      %p76 = scmp.eq.s32.totalorder %s15, 0
      %p77 = por %p75, %p76
      %p78 = scmp.ne.s32.totalorder %s70, %s72
      %p79 = scmp.eq.s32.totalorder %s20, 1
      %p80 = por %p78, %p79
      %p81 = scmp.ne.s32.totalorder %s72, %s73
      %p82 = scmp.eq.s32.totalorder %s20, 0
      %p83 = por %p81, %p82
      %p84 = scmp.ne.s32.totalorder %s72, %s73
      %p85 = scmp.eq.s32.totalorder %s21, 1
      %p86 = por %p84, %p85
      %p88 = scmp.ne.s32.totalorder %s73, %s87
      %p89 = scmp.eq.s32.totalorder %s21, 0
      %p90 = por %p88, %p89
      %s91 = ssub.s32 %s15, %s22
      %p92 = scmp.eq.s32.totalorder %s91, 0
      %s94 = sadd.s32 %s93, 1
      %s95 = scalar_select %p92, %s93, %s94
      %p98 = pneg %p92
      %p99 = scmp.eq.s32.totalorder %s15, 1
      %p100 = por %p98, %p99
      %p101 = scmp.ne.s32.totalorder %s93, %s96
      %p102 = scmp.eq.s32.totalorder %s15, 0
      %p103 = por %p101, %p102
      %p104 = scmp.ne.s32.totalorder %s93, %s96
      %p105 = scmp.eq.s32.totalorder %s20, 1
      %p106 = por %p104, %p105
      %p107 = scmp.ne.s32.totalorder %s96, %s97
      %p108 = scmp.eq.s32.totalorder %s20, 0
      %p109 = por %p107, %p108
      %p110 = scmp.ne.s32.totalorder %s96, %s97
      %p111 = scmp.eq.s32.totalorder %s21, 1
      %p112 = por %p110, %p111
      %p114 = scmp.ne.s32.totalorder %s97, %s113
      %p115 = scmp.eq.s32.totalorder %s21, 0
      %p116 = por %p114, %p115
      %p117 = scmp.le.s32.totalorder 1, %s15
      %p118 = scmp.lt.s32.totalorder %s15, 3
      %p119 = pnand %p117, %p118
      %p120 = pneg %p119
      // Predicated region
      $region9: #{tpu_custom_call.1} parent=5 // pred_check
        _
      $region10: #{tpu_custom_call.1} parent=5 // pred_check_branch
        %122 = sbr.rel (%p119) target = $region12
      $region11: #{tpu_custom_call.1} parent=5 // pred_region
        %s123 = ssub.s32 %s15, 1
        // Predicated region
        $region13: #{tpu_custom_call.1} parent=11 // pred_check
          %p124 = pneg %p62
        $region14: #{tpu_custom_call.1} parent=11 // pred_check_branch
          %126 = sbr.rel (%p124) target = $region16
        $region15: #{tpu_custom_call.1} parent=11 // pred_region
          _
        $region16: #{tpu_custom_call.1} parent=11 // pred_fallthru
          _
        // Predicated region
        $region17: #{tpu_custom_call.1} parent=11 // pred_check
          %p127 = pneg %p83
        $region18: #{tpu_custom_call.1} parent=11 // pred_check_branch
          %129 = sbr.rel (%p127) target = $region20
        $region19: #{tpu_custom_call.1} parent=11 // pred_region
          _
        $region20: #{tpu_custom_call.1} parent=11 // pred_fallthru
          _
      $region12: #{tpu_custom_call.1} parent=5 // pred_fallthru
        _
      %p130 = scmp.lt.s32.totalorder %s15, 2
      // Predicated region
      $region21: #{tpu_custom_call.1} parent=5 // pred_check
        %p131 = pneg %p130
      $region22: #{tpu_custom_call.1} parent=5 // pred_check_branch
        %133 = sbr.rel (%p131) target = $region24
      $region23: #{tpu_custom_call.1} parent=5 // pred_region
        // Predicated region
        $region25: #{tpu_custom_call.1} parent=23 // pred_check
          %p134 = pneg %p35
        $region26: #{tpu_custom_call.1} parent=23 // pred_check_branch
          %136 = sbr.rel (%p134) target = $region28
        $region27: #{tpu_custom_call.1} parent=23 // pred_region
          %s137 = sand.u32 %s25, 1
          %s138 = scalar_lea.sflag [#allocation3], %s137
          %s139 = sand.u32 %s25, 1
          %s140 = smul.addr %s139, 16
          %s141 = scalar_lea.vmem [#allocation2], %s140
          %s143 = ssub.s32 256, 256
          %144 = vsyncadd %s138, %s143
          %s145 = smul.addr %s15, 4
          %s146 = smul.addr %s145, 64
          %s147 = scalar_lea.hbm %s0, %s146
          %s149 = sshll.u32 %s141, 4
          %s150 = int_to_ptr.vmem [resolvable:$true] %s149
          %152 = dma.hbm_to_vmem [thread:$0]  %s147, 256, %s150, %s138
        $region28: #{tpu_custom_call.1} parent=23 // pred_fallthru
          _
      $region24: #{tpu_custom_call.1} parent=5 // pred_fallthru
        _
      %p153 = scmp.le.s32.totalorder 1, %s15
      %p154 = scmp.lt.s32.totalorder %s15, 3
      %p155 = pnand %p153, %p154
      %p156 = pneg %p155
      // Predicated region
      $region29: #{tpu_custom_call.1} parent=5 // pred_check
        _
      $region30: #{tpu_custom_call.1} parent=5 // pred_check_branch
        %158 = sbr.rel (%p155) target = $region32
      $region31: #{tpu_custom_call.1} parent=5 // pred_region
        %s159 = ssub.s32 %s15, 1
        %s160 = sand.u32 %s28, 1
        %s161 = scalar_lea.sflag [#allocation3], %s160
        %s162 = sand.u32 %s28, 1
        %s163 = smul.addr %s162, 16
        %s164 = scalar_lea.vmem [#allocation2], %s163
        // Predicated region
        $region33: #{tpu_custom_call.1} parent=31 // pred_check
          %p165 = pneg %p41
        $region34: #{tpu_custom_call.1} parent=31 // pred_check_branch
          %167 = sbr.rel (%p165) target = $region36
        $region35: #{tpu_custom_call.1} parent=31 // pred_region
          %168 = dma.done %s161, 256
        $region36: #{tpu_custom_call.1} parent=31 // pred_fallthru
          _
        %s169 = sand.u32 %s28, 1
        %s170 = scalar_lea.sflag [#allocation3], %s169
        %s171 = sand.u32 %s28, 1
        %s172 = smul.addr %s171, 16
        %s173 = scalar_lea.vmem [#allocation2], %s172
        %p174 = pneg %p41
        %p175 = pneg %p38
        %p176 = pneg %p62
        %p177 = pneg %p59
        %p178 = pneg %p83
        %p179 = pneg %p80
        %p180 = pneg %p109
        %p181 = pneg %p106
        %s182 = sand.u32 %s96, 1
        %s183 = scalar_lea.sflag [#allocation4], %s182
        %s184 = sand.u32 %s96, 1
        %s185 = smul.addr %s184, 24
        %s186 = scalar_lea.vmem [#allocation5], %s185
        %v187 = vld [vmem:[%s1] sm:$0xf]
        %v188 = vld [vmem:[%s164] sm:$0xff]
        %v189 = vld [vmem:[%s164 + $0x8] sm:$0xf]
        %191 = vset.pattern.permute.xlu0 0
        %192 = vperm.xlu0 %191, %v187
        %v193 = vpop.permute.xlu0 %192
        %v195 = vunpack.c.l.s4 839922192
        %v196 = vunpack.c.0.s8 %v195
        %v197 = vlaneseq
        %v198 = vshrl.u32 %v197, 7
        %v199 = vsub.s32 %v196, %v198
        %v200 = vrot.slane %v193, %v199
        %v202 = vmul.f32 %v188, %v200
        %v203 = vmul.f32 %v189, %v200
        %v204 = vld [vmem:[%s164] sm:$0xff]
        %v205 = vld [vmem:[%s164 + $0x8] sm:$0xff]
        %206 = vset.pattern.permute.xlu0 1
        %207 = vperm.xlu0 %206, %v187
        %v208 = vpop.permute.xlu0 %207
        %v210 = vunpack.c.l.s4 839922192
        %v211 = vunpack.c.0.s8 %v210
        %v212 = vlaneseq
        %v213 = vshrl.u32 %v212, 7
        %v214 = vsub.s32 %v211, %v213
        %v215 = vrot.slane %v208, %v214
        %v217 = vmul.f32 %v204, %v215
        %v218 = vmul.f32 %v205, %v215
        %221 = vrot.lane.b32.xlu0 %v217, 127
        %v222 = vpop.permute.xlu0 %221
        %223 = vrot.lane.b32.xlu0 %v218, 127
        %v224 = vpop.permute.xlu0 %223
        %v225 = vrot.slane %v222, 4
        %v226 = vrot.slane %v224, 4
        %vm227 = vcmask 1043456
        %v228 = vsel %vm227, %v225, %v226
        %vm229 = vcmask 1039360
        %v230 = vsel %vm229, %v222, %v228
        %v231 = vsel %vm229, %v224, %v226
        %v234 = vadd.f32 %v202, %v230
        %v235 = vadd.f32 %v203, %v231
        %236 = vset.pattern.permute.xlu0 2
        %237 = vperm.xlu0 %236, %v187
        %v238 = vpop.permute.xlu0 %237
        %v240 = vunpack.c.l.s4 839922192
        %v241 = vunpack.c.0.s8 %v240
        %v242 = vlaneseq
        %v243 = vshrl.u32 %v242, 7
        %v244 = vsub.s32 %v241, %v243
        %v245 = vrot.slane %v238, %v244
        %v247 = vmul.f32 %v204, %v245
        %v248 = vmul.f32 %v205, %v245
        %251 = vrot.lane.b32.xlu0 %v247, 126
        %v252 = vpop.permute.xlu0 %251
        %253 = vrot.lane.b32.xlu0 %v248, 126
        %v254 = vpop.permute.xlu0 %253
        %v255 = vrot.slane %v252, 4
        %v256 = vrot.slane %v254, 4
        %v257 = vsel %vm227, %v255, %v256
        %vm258 = vcmask 1031168
        %v259 = vsel %vm258, %v252, %v257
        %v260 = vsel %vm258, %v254, %v256
        %v263 = vadd.f32 %v234, %v259
        %v264 = vadd.f32 %v235, %v260
        %265 = vset.pattern.permute.xlu0 3
        %266 = vperm.xlu0 %265, %v187
        %v267 = vpop.permute.xlu0 %266
        %v269 = vunpack.c.l.s4 839922192
        %v270 = vunpack.c.0.s8 %v269
        %v271 = vlaneseq
        %v272 = vshrl.u32 %v271, 7
        %v273 = vsub.s32 %v270, %v272
        %v274 = vrot.slane %v267, %v273
        %v276 = vmul.f32 %v204, %v274
        %v277 = vmul.f32 %v205, %v274
        %280 = vrot.lane.b32.xlu0 %v276, 110
        %v281 = vpop.permute.xlu0 %280
        %282 = vrot.lane.b32.xlu0 %v277, 110
        %v283 = vpop.permute.xlu0 %282
        %v284 = vrot.slane %v281, 4
        %v285 = vrot.slane %v283, 4
        %v286 = vsel %vm227, %v284, %v285
        %vm287 = vcmask 900096
        %v288 = vsel %vm287, %v281, %v286
        %v289 = vsel %vm287, %v283, %v285
        %v292 = vadd.f32 %v263, %v288
        %v293 = vadd.f32 %v264, %v289
        %294 = vset.pattern.permute.xlu0 4
        %295 = vperm.xlu0 %294, %v187
        %v296 = vpop.permute.xlu0 %295
        %v298 = vunpack.c.l.s4 839922192
        %v299 = vunpack.c.0.s8 %v298
        %v300 = vlaneseq
        %v301 = vshrl.u32 %v300, 7
        %v302 = vsub.s32 %v299, %v301
        %v303 = vrot.slane %v296, %v302
        %v305 = vmul.f32 %v204, %v303
        %v306 = vmul.f32 %v205, %v303
        %309 = vrot.lane.b32.xlu0 %v305, 109
        %v310 = vpop.permute.xlu0 %309
        %311 = vrot.lane.b32.xlu0 %v306, 109
        %v312 = vpop.permute.xlu0 %311
        %v313 = vrot.slane %v310, 4
        %v314 = vrot.slane %v312, 4
        %v315 = vsel %vm227, %v313, %v314
        %vm316 = vcmask 891904
        %v317 = vsel %vm316, %v310, %v315
        %v318 = vsel %vm316, %v312, %v314
        %v321 = vadd.f32 %v292, %v317
        %v322 = vadd.f32 %v293, %v318
        %323 = vset.pattern.permute.xlu0 5
        %324 = vperm.xlu0 %323, %v187
        %v325 = vpop.permute.xlu0 %324
        %v327 = vunpack.c.l.s4 839922192
        %v328 = vunpack.c.0.s8 %v327
        %v329 = vlaneseq
        %v330 = vshrl.u32 %v329, 7
        %v331 = vsub.s32 %v328, %v330
        %v332 = vrot.slane %v325, %v331
        %v334 = vmul.f32 %v204, %v332
        %v335 = vmul.f32 %v205, %v332
        %338 = vrot.lane.b32.xlu0 %v334, 108
        %v339 = vpop.permute.xlu0 %338
        %340 = vrot.lane.b32.xlu0 %v335, 108
        %v341 = vpop.permute.xlu0 %340
        %v342 = vrot.slane %v339, 4
        %v343 = vrot.slane %v341, 4
        %v344 = vsel %vm227, %v342, %v343
        %vm345 = vcmask 883712
        %v346 = vsel %vm345, %v339, %v344
        %v347 = vsel %vm345, %v341, %v343
        %v350 = vadd.f32 %v321, %v346
        %v351 = vadd.f32 %v322, %v347
        %352 = vset.pattern.permute.xlu0 6
        %353 = vperm.xlu0 %352, %v187
        %v354 = vpop.permute.xlu0 %353
        %v356 = vunpack.c.l.s4 839922192
        %v357 = vunpack.c.0.s8 %v356
        %v358 = vlaneseq
        %v359 = vshrl.u32 %v358, 7
        %v360 = vsub.s32 %v357, %v359
        %v361 = vrot.slane %v354, %v360
        %v363 = vmul.f32 %v204, %v361
        %v364 = vmul.f32 %v205, %v361
        %367 = vrot.lane.b32.xlu0 %v363, 92
        %v368 = vpop.permute.xlu0 %367
        %369 = vrot.lane.b32.xlu0 %v364, 92
        %v370 = vpop.permute.xlu0 %369
        %v371 = vrot.slane %v368, 4
        %v372 = vrot.slane %v370, 4
        %v373 = vsel %vm227, %v371, %v372
        %vm374 = vcmask 752640
        %v375 = vsel %vm374, %v368, %v373
        %v376 = vsel %vm374, %v370, %v372
        %v379 = vadd.f32 %v350, %v375
        %v380 = vadd.f32 %v351, %v376
        %381 = vset.pattern.permute.xlu0 7
        %382 = vperm.xlu0 %381, %v187
        %v383 = vpop.permute.xlu0 %382
        %v385 = vunpack.c.l.s4 839922192
        %v386 = vunpack.c.0.s8 %v385
        %v387 = vlaneseq
        %v388 = vshrl.u32 %v387, 7
        %v389 = vsub.s32 %v386, %v388
        %v390 = vrot.slane %v383, %v389
        %v392 = vmul.f32 %v204, %v390
        %v393 = vmul.f32 %v205, %v390
        %396 = vrot.lane.b32.xlu0 %v392, 91
        %v397 = vpop.permute.xlu0 %396
        %398 = vrot.lane.b32.xlu0 %v393, 91
        %v399 = vpop.permute.xlu0 %398
        %v400 = vrot.slane %v397, 4
        %v401 = vrot.slane %v399, 4
        %v402 = vsel %vm227, %v400, %v401
        %vm403 = vcmask 744448
        %v404 = vsel %vm403, %v397, %v402
        %v405 = vsel %vm403, %v399, %v401
        %v408 = vadd.f32 %v379, %v404
        %v409 = vadd.f32 %v380, %v405
        %410 = vset.pattern.permute.xlu0 8
        %411 = vperm.xlu0 %410, %v187
        %v412 = vpop.permute.xlu0 %411
        %v414 = vunpack.c.l.s4 839922192
        %v415 = vunpack.c.0.s8 %v414
        %v416 = vlaneseq
        %v417 = vshrl.u32 %v416, 7
        %v418 = vsub.s32 %v415, %v417
        %v419 = vrot.slane %v412, %v418
        %v421 = vmul.f32 %v204, %v419
        %v422 = vmul.f32 %v205, %v419
        %425 = vrot.lane.b32.xlu0 %v421, 90
        %v426 = vpop.permute.xlu0 %425
        %427 = vrot.lane.b32.xlu0 %v422, 90
        %v428 = vpop.permute.xlu0 %427
        %v429 = vrot.slane %v426, 4
        %v430 = vrot.slane %v428, 4
        %v431 = vsel %vm227, %v429, %v430
        %vm432 = vcmask 736256
        %v433 = vsel %vm432, %v426, %v431
        %v434 = vsel %vm432, %v428, %v430
        %v437 = vadd.f32 %v408, %v433
        %v438 = vadd.f32 %v409, %v434
        %v439 = vld [vmem:[%s2] sm:$0xff]
        %v442 = vcombine.high %v437, %v437
        %vm443 = vcmask 31744
        %v445 = vsel %vm443, %v439, 0
        %v447 = vsel %vm227, %v437, 0
        %v449 = vsel %vm227, %v442, 0
        %v451 = vsel %vm227, %v438, 0
        %453 = vmatprep.subr.mxu0 %v449
        %454 = vmatpush1.msra.mxu0 %v447
        %455 = vmatprep.subr.mxu0 0.0
        %456 = vmatpush1.msra.mxu0 0.0
        %457 = vmatprep.subr.mxu0 0.0
        %458 = vmatpush1.msra.mxu0 0.0
        %459 = vmatprep.subr.mxu0 0.0
        %460 = vmatpush1.msra.mxu0 0.0
        %461 = vmatprep.subr.mxu0 0.0
        %462 = vmatpush1.msra.mxu0 0.0
        %463 = vmatprep.subr.mxu0 0.0
        %464 = vmatpush1.msra.mxu0 0.0
        %465 = vmatprep.subr.mxu0 0.0
        %466 = vmatpush1.msra.mxu0 0.0
        %467 = vmatprep.subr.mxu0 0.0
        %468 = vmatpush1.msra.mxu0 0.0
        %469 = vmatprep.subr.mxu0 0.0
        %470 = vmatpush1.msra.mxu0 0.0
        %471 = vmatprep.subr.mxu0 0.0
        %472 = vmatpush1.msra.mxu0 0.0
        %473 = vmatprep.subr.mxu0 0.0
        %474 = vmatpush1.msra.mxu0 0.0
        %475 = vmatprep.subr.mxu0 0.0
        %476 = vmatpush1.msra.mxu0 0.0
        %477 = vmatprep.subr.mxu0 0.0
        %478 = vmatpush1.msra.mxu0 0.0
        %479 = vmatprep.subr.mxu0 0.0
        %480 = vmatpush1.msra.mxu0 0.0
        %481 = vmatprep.subr.mxu0 0.0
        %482 = vmatpush1.msra.mxu0 0.0
        %483 = vmatprep.subr.mxu0 0.0
        %484 = vmatpush1.msra.mxu0 0.0
        %485 = vmatprep.subr.mxu0 0.0
        %486 = vmatpush1.msra.mxu0 0.0
        %487 = vmatprep.subr.mxu0 0.0
        %488 = vmatpush1.msra.mxu0 0.0
        %489 = vmatprep.subr.mxu0 0.0
        %490 = vmatpush1.msra.mxu0 0.0
        %491 = vmatprep.subr.mxu0 0.0
        %492 = vmatpush1.msra.mxu0 0.0
        %493 = vmatprep.subr.mxu0 0.0
        %494 = vmatpush1.msra.mxu0 0.0
        %495 = vmatprep.subr.mxu0 0.0
        %496 = vmatpush1.msra.mxu0 0.0
        %497 = vmatprep.subr.mxu0 0.0
        %498 = vmatpush1.msra.mxu0 0.0
        %499 = vmatprep.subr.mxu0 0.0
        %500 = vmatpush1.msra.mxu0 0.0
        %501 = vmatprep.subr.mxu0 0.0
        %502 = vmatpush1.msra.mxu0 0.0
        %503 = vmatprep.subr.mxu0 0.0
        %504 = vmatpush1.msra.mxu0 0.0
        %505 = vmatprep.subr.mxu0 0.0
        %506 = vmatpush1.msra.mxu0 0.0
        %507 = vmatprep.subr.mxu0 0.0
        %508 = vmatpush1.msra.mxu0 0.0
        %509 = vmatprep.subr.mxu0 0.0
        %510 = vmatpush1.msra.mxu0 0.0
        %511 = vmatprep.subr.mxu0 0.0
        %512 = vmatpush1.msra.mxu0 0.0
        %513 = vmatprep.subr.mxu0 0.0
        %514 = vmatpush1.msra.mxu0 0.0
        %515 = vmatprep.subr.mxu0 0.0
        %516 = vmatpush1.msra.mxu0 0.0
        %517 = vmatprep.mubr.f32.mxu0 0.0
        %518 = vmatmul.mubr.f32.gmra.mrb[0].mxu0 %v445
        %v519 = vpop.f32.mrb[0].mxu0
        %v520 = vadd.f32 0.0, %v519
        %v521 = vpop.f32.mrb[0].mxu0
        %v522 = vadd.f32 0.0, %v521
        %523 = vdwg.mxu0
        %524 = vmatprep.subr.mxu0 0.0
        %525 = vmatpush1.msra.mxu0 %v451
        %526 = vmatprep.subr.mxu0 0.0
        %527 = vmatpush1.msra.mxu0 0.0
        %528 = vmatprep.subr.mxu0 0.0
        %529 = vmatpush1.msra.mxu0 0.0
        %530 = vmatprep.subr.mxu0 0.0
        %531 = vmatpush1.msra.mxu0 0.0
        %532 = vmatprep.subr.mxu0 0.0
        %533 = vmatpush1.msra.mxu0 0.0
        %534 = vmatprep.subr.mxu0 0.0
        %535 = vmatpush1.msra.mxu0 0.0
        %536 = vmatprep.subr.mxu0 0.0
        %537 = vmatpush1.msra.mxu0 0.0
        %538 = vmatprep.subr.mxu0 0.0
        %539 = vmatpush1.msra.mxu0 0.0
        %540 = vmatprep.subr.mxu0 0.0
        %541 = vmatpush1.msra.mxu0 0.0
        %542 = vmatprep.subr.mxu0 0.0
        %543 = vmatpush1.msra.mxu0 0.0
        %544 = vmatprep.subr.mxu0 0.0
        %545 = vmatpush1.msra.mxu0 0.0
        %546 = vmatprep.subr.mxu0 0.0
        %547 = vmatpush1.msra.mxu0 0.0
        %548 = vmatprep.subr.mxu0 0.0
        %549 = vmatpush1.msra.mxu0 0.0
        %550 = vmatprep.subr.mxu0 0.0
        %551 = vmatpush1.msra.mxu0 0.0
        %552 = vmatprep.subr.mxu0 0.0
        %553 = vmatpush1.msra.mxu0 0.0
        %554 = vmatprep.subr.mxu0 0.0
        %555 = vmatpush1.msra.mxu0 0.0
        %556 = vmatprep.subr.mxu0 0.0
        %557 = vmatpush1.msra.mxu0 0.0
        %558 = vmatprep.subr.mxu0 0.0
        %559 = vmatpush1.msra.mxu0 0.0
        %560 = vmatprep.subr.mxu0 0.0
        %561 = vmatpush1.msra.mxu0 0.0
        %562 = vmatprep.subr.mxu0 0.0
        %563 = vmatpush1.msra.mxu0 0.0
        %564 = vmatprep.subr.mxu0 0.0
        %565 = vmatpush1.msra.mxu0 0.0
        %566 = vmatprep.subr.mxu0 0.0
        %567 = vmatpush1.msra.mxu0 0.0
        %568 = vmatprep.subr.mxu0 0.0
        %569 = vmatpush1.msra.mxu0 0.0
        %570 = vmatprep.subr.mxu0 0.0
        %571 = vmatpush1.msra.mxu0 0.0
        %572 = vmatprep.subr.mxu0 0.0
        %573 = vmatpush1.msra.mxu0 0.0
        %574 = vmatprep.subr.mxu0 0.0
        %575 = vmatpush1.msra.mxu0 0.0
        %576 = vmatprep.subr.mxu0 0.0
        %577 = vmatpush1.msra.mxu0 0.0
        %578 = vmatprep.subr.mxu0 0.0
        %579 = vmatpush1.msra.mxu0 0.0
        %580 = vmatprep.subr.mxu0 0.0
        %581 = vmatpush1.msra.mxu0 0.0
        %582 = vmatprep.subr.mxu0 0.0
        %583 = vmatpush1.msra.mxu0 0.0
        %584 = vmatprep.subr.mxu0 0.0
        %585 = vmatpush1.msra.mxu0 0.0
        %586 = vmatprep.subr.mxu0 0.0
        %587 = vmatpush1.msra.mxu0 0.0
        %588 = vmatprep.mubr.f32.mxu0 0.0
        %589 = vmatmul.mubr.f32.gmra.mrb[0].mxu0 %v445
        %v590 = vpop.f32.mrb[0].mxu0
        %v591 = vadd.f32 0.0, %v590
        %v592 = vpop.f32.mrb[0].mxu0
        %593 = vdwg.mxu0
        %594 = vst [vmem:[%s186] sm:$0xff] %v520
        %595 = vst [vmem:[%s186 + $0x8] sm:$0xff] %v522
        %596 = vst [vmem:[%s186 + $0x10] sm:$0xff] %v591
        %s597 = sand.u32 %s96, 1
        %s598 = scalar_lea.sflag [#allocation4], %s597
        %s599 = sand.u32 %s96, 1
        %s600 = smul.addr %s599, 24
        %s601 = scalar_lea.vmem [#allocation5], %s600
        // Predicated region
        $region37: #{tpu_custom_call.1} parent=31 // pred_check
          %p602 = pneg %p106
        $region38: #{tpu_custom_call.1} parent=31 // pred_check_branch
          %604 = sbr.rel (%p602) target = $region40
        $region39: #{tpu_custom_call.1} parent=31 // pred_region
          %s606 = ssub.s32 384, 384
          %607 = vsyncadd %s598, %s606
          %s608 = smul.addr %s20, 3
          %s609 = smul.addr %s608, 128
          %s610 = scalar_lea.hbm %s3, %s609
          %s612 = sshll.u32 %s601, 4
          %s613 = int_to_ptr.vmem [resolvable:$true] %s612
          %615 = dma.vmem_to_hbm [thread:$0]  %s613, 384, %s610, %s598
        $region40: #{tpu_custom_call.1} parent=31 // pred_fallthru
          _
      $region32: #{tpu_custom_call.1} parent=5 // pred_fallthru
        _
      %p616 = scmp.le.s32.totalorder 2, %s15
      // Predicated region
      $region41: #{tpu_custom_call.1} parent=5 // pred_check
        %p617 = pneg %p616
      $region42: #{tpu_custom_call.1} parent=5 // pred_check_branch
        %619 = sbr.rel (%p617) target = $region44
      $region43: #{tpu_custom_call.1} parent=5 // pred_region
        %s620 = ssub.s32 %s15, 2
        // Predicated region
        $region45: #{tpu_custom_call.1} parent=43 // pred_check
          %p621 = pneg %p112
        $region46: #{tpu_custom_call.1} parent=43 // pred_check_branch
          %623 = sbr.rel (%p621) target = $region48
        $region47: #{tpu_custom_call.1} parent=43 // pred_region
          %s624 = sand.u32 %s97, 1
          %s625 = scalar_lea.sflag [#allocation4], %s624
          %s626 = sand.u32 %s97, 1
          %s627 = smul.addr %s626, 24
          %s628 = scalar_lea.vmem [#allocation5], %s627
          %629 = dma.done %s625, 384
        $region48: #{tpu_custom_call.1} parent=43 // pred_fallthru
          _
      $region44: #{tpu_custom_call.1} parent=5 // pred_fallthru
        _
    $region6: #{tpu_custom_call.1} parent=1 // loop_footer
      %s19 = sadd.s32 1, %s15
    $region7: #{tpu_custom_call.1} parent=1 // loop_footer_branch
      %14 = sbr.rel target = $region3
    $region8: #{tpu_custom_call.1} parent=1 // loop_exit
      _
    %630 = vsyncpa [#allocation3], 1
    %s631 = scalar_lea.sflag [#allocation3], 1
    %632 = vsyncpa %s631, 1
    %633 = vsyncpa [#allocation4], 1
    %s634 = scalar_lea.sflag [#allocation4], 1
    %635 = vsyncpa %s634, 1

</llo_original>
